<compile_context>
chip_gen: v7x
topology: tpu7x:2x2x1
jax: 0.10.0
libtpu: 0.0.40
codegen_flags: <defaults>
</compile_context>

<pallas_src>
import functools

import jax
import jax.numpy as jnp
from jax.experimental import pallas as pl
from jax.experimental.pallas import tpu as pltpu


NUM_ACTIONS = 2        # `num_outputs = 2` in PolicyNet_Single
HIDDEN1 = 128          # fc1 out
HIDDEN2 = 64           # fc2 out
LEAKY_SLOPE = 0.01     # F.leaky_relu default negative_slope


def _round_up(v, m):
    return ((v + m - 1) // m) * m


def _leaky_relu(x):
    # exact for slope in (0, 1): max(x, slope*x)
    return jnp.maximum(x, LEAKY_SLOPE * x)


# ----------------------------- Pallas kernel -------------------------------
def _policy_kernel(*refs, num_actions, slab_width, compute_argmax, has_mask):
    if has_mask:
        (x_ref, w1_ref, b1_ref, w2_ref, b2_ref, w3_ref, b3_ref,
         mask_ref, out_ref) = refs
    else:
        (x_ref, w1_ref, b1_ref, w2_ref, b2_ref, w3_ref, b3_ref,
         out_ref) = refs
        mask_ref = None

    x = x_ref[...]                                              # (TM, D) bf16

    # fc1 -> leaky_relu   (bf16 operands, f32 accumulate, f32 element-wise)
    h1 = jnp.dot(x, w1_ref[...], preferred_element_type=jnp.float32) + b1_ref[...]
    h1 = _leaky_relu(h1).astype(jnp.bfloat16)

    # fc2 -> leaky_relu
    h2 = jnp.dot(h1, w2_ref[...], preferred_element_type=jnp.float32) + b2_ref[...]
    h2 = _leaky_relu(h2).astype(jnp.bfloat16)

    # fc3 -> logits mu
    mu = jnp.dot(h2, w3_ref[...], preferred_element_type=jnp.float32) + b3_ref[...]

    # available_actions masking: mu[avail == 0] = -1e10
    if mask_ref is not None:
        mu = jnp.where(mask_ref[...] == 0, jnp.float32(-1e10), mu)

    # numerically-stable softmax / log_softmax (all f32; reciprocal on the EUP slot)
    m = jnp.max(mu, axis=-1, keepdims=True)
    z = mu - m
    e = jnp.exp(z)
    s = jnp.sum(e, axis=-1, keepdims=True)
    inv_s = pl.reciprocal(s, approx=False)
    prob = e * inv_s
    logp = z - jnp.log(s)
    ent = -(logp * prob)                                        # per-element entropy

    if compute_argmax:
        # prob.max(-1)[1]: first maximal index (min over candidate ids)
        ids = jax.lax.broadcasted_iota(jnp.int32, prob.shape, 1)
        is_max = prob >= jnp.max(prob, axis=-1, keepdims=True)
        act = jnp.min(jnp.where(is_max, ids, num_actions), axis=-1, keepdims=True)
        act_f = act.astype(jnp.float32)
    else:
        act_f = jnp.zeros((prob.shape[0], 1), jnp.float32)

    pad_cols = slab_width - (3 * num_actions + 1)
    pieces = [prob, logp, ent, act_f]
    if pad_cols:
        pieces.append(jnp.zeros((prob.shape[0], pad_cols), jnp.float32))
    # single packed writeback: [prob | logp | ent | argmax | pad]
    out_ref[...] = jnp.concatenate(pieces, axis=-1)


# ------------------------------ wrapper ------------------------------------
def policy_net_single_forward(params, x, test=False, available_actions=None, key=None):
    """Replicates PolicyNet_Single.forward (non-noisy branch).

    x: (B, R, input_dim) float.
    Returns (action, entropy, log_prob, prob) with the same shapes as the
    PyTorch module (entropy is returned densely per-element, see TODO).
    """
    x = jnp.asarray(x)
    B, R, D = x.shape
    N = NUM_ACTIONS
    M = B * R

    # Row tiling: largest reasonable tile; this kernel is HBM/latency bound so
    # bigger tiles amortize the per-step grid overhead.
    TM = 1024 if M >= 1024 else max(8, _round_up(M, 8))
    M_pad = _round_up(M, TM)
    grid = (M_pad // TM,)

    xf = x.reshape(M, D).astype(jnp.bfloat16)
    if M_pad != M:
        xf = jnp.pad(xf, ((0, M_pad - M), (0, 0)))

    has_mask = available_actions is not None
    inputs = [xf, params["w1"], params["b1"], params["w2"], params["b2"],
              params["w3"], params["b3"]]
    in_specs = [
        pl.BlockSpec((TM, D), lambda i: (i, 0)),            # x: tiled over rows
        pl.BlockSpec((D, HIDDEN1), lambda i: (0, 0)),       # weights/biases: resident
        pl.BlockSpec((1, HIDDEN1), lambda i: (0, 0)),
        pl.BlockSpec((HIDDEN1, HIDDEN2), lambda i: (0, 0)),
        pl.BlockSpec((1, HIDDEN2), lambda i: (0, 0)),
        pl.BlockSpec((HIDDEN2, N), lambda i: (0, 0)),
        pl.BlockSpec((1, N), lambda i: (0, 0)),
    ]
    if has_mask:
        av = jnp.asarray(available_actions).reshape(M, N).astype(jnp.float32)
        if M_pad != M:
            av = jnp.pad(av, ((0, M_pad - M), (0, 0)), constant_values=1.0)
        inputs.append(av)
        in_specs.append(pl.BlockSpec((TM, N), lambda i: (i, 0)))

    slab_width = _round_up(3 * N + 1, 8)                    # [prob|logp|ent|act|pad]
    kernel = functools.partial(
        _policy_kernel, num_actions=N, slab_width=slab_width,
        compute_argmax=bool(test), has_mask=has_mask)

    slab = pl.pallas_call(
        kernel,
        out_shape=jax.ShapeDtypeStruct((M_pad, slab_width), jnp.float32),
        grid=grid,
        in_specs=in_specs,
        out_specs=pl.BlockSpec((TM, slab_width), lambda i: (i, 0)),
        compiler_params=pltpu.CompilerParams(
            dimension_semantics=("parallel",)),
    )(*inputs)

    slab = slab[:M]
    prob = slab[:, 0:N]
    logp = slab[:, N:2 * N]
    ent = slab[:, 2 * N:3 * N]

    entropy = ent.reshape(B, R, N)
    if has_mask:
        # TODO(synk): original does `entropy[available_actions != 0]` (dynamic-shape
        # boolean gather); we return the dense per-element entropy zeroed at
        # unavailable actions instead.
        entropy = entropy * (jnp.asarray(available_actions) != 0).astype(entropy.dtype)

    if test:
        action = slab[:, 3 * N].astype(jnp.int32).reshape(B, R)   # prob.max(-1)[1]
        log_prob = logp.reshape(B, R, N)
        prob_out = prob.reshape(B, R, N)
    else:
        # glue: categorical sampling (== prob.multinomial(1)) + gather, in plain JAX.
        assert key is not None
        action = jax.random.categorical(key, logp, axis=-1)[:, None]   # (B*R, 1)
        log_prob = jnp.take_along_axis(logp, action, axis=-1)          # (B*R, 1)
        prob_out = prob                                                # (B*R, N)

    return action, entropy, log_prob, prob_out


# --------------------------- parameter init --------------------------------
def _norm_col_init(key, shape, std):
    w = jax.random.normal(key, shape, dtype=jnp.float32)
    return w * std / jnp.sqrt(jnp.sum(w * w, axis=1, keepdims=True))


def init_params(key, input_dim):
    k1, k2, k3, k4, k5 = jax.random.split(key, 5)
    # fc1: norm_col_init(0.1), zero bias (as in the PyTorch ctor)
    w1 = _norm_col_init(k1, (HIDDEN1, input_dim), 0.1)               # (out, in)
    b1 = jnp.zeros((1, HIDDEN1), jnp.float32)
    # fc2 / fc3: default PyTorch Linear uniform init
    lim2 = 1.0 / jnp.sqrt(jnp.float32(HIDDEN1))
    w2 = jax.random.uniform(k2, (HIDDEN2, HIDDEN1), jnp.float32, -lim2, lim2)
    b2 = jax.random.uniform(k3, (1, HIDDEN2), jnp.float32, -lim2, lim2)
    lim3 = 1.0 / jnp.sqrt(jnp.float32(HIDDEN2))
    w3 = jax.random.uniform(k4, (NUM_ACTIONS, HIDDEN2), jnp.float32, -lim3, lim3)
    b3 = jax.random.uniform(k5, (1, NUM_ACTIONS), jnp.float32, -lim3, lim3)
    # kernel uses transposed (in, out) weights; matmul operands stored in bf16.
    return {
        "w1": w1.T.astype(jnp.bfloat16), "b1": b1,
        "w2": w2.T.astype(jnp.bfloat16), "b2": b2,
        "w3": w3.T.astype(jnp.bfloat16), "b3": b3,
    }


# --------------------------- pure-JAX reference -----------------------------
def _reference(params, x):
    B, R, D = x.shape
    xf = x.reshape(B * R, D).astype(jnp.float32)
    w1 = params["w1"].astype(jnp.float32)
    w2 = params["w2"].astype(jnp.float32)
    w3 = params["w3"].astype(jnp.float32)
    h1 = _leaky_relu(xf @ w1 + params["b1"])
    h2 = _leaky_relu(h1 @ w2 + params["b2"])
    mu = h2 @ w3 + params["b3"]
    prob = jax.nn.softmax(mu, axis=-1)
    logp = jax.nn.log_softmax(mu, axis=-1)
    ent = -(logp * prob)
    return (prob.reshape(B, R, -1), logp.reshape(B, R, -1), ent.reshape(B, R, -1))


if __name__ == "__main__":
    key = jax.random.PRNGKey(0)
    B, R, D = 2, 4, 32
    kp, kx, ks = jax.random.split(key, 3)
    params = init_params(kp, D)
    x = jax.random.normal(kx, (B, R, D), dtype=jnp.float32)

    # test=True path (deterministic argmax action)
    action, entropy, log_prob, prob = policy_net_single_forward(params, x, test=True)
    jax.block_until_ready((action, entropy, log_prob, prob))

    # correctness spot-check vs. pure-JAX f32 reference (bf16 matmuls -> loose tol)
    p_ref, lp_ref, e_ref = _reference(params, x)
    assert jnp.allclose(prob, p_ref, atol=3e-2, rtol=3e-2)
    assert jnp.allclose(log_prob, lp_ref, atol=3e-2, rtol=3e-2)
    assert jnp.allclose(entropy, e_ref, atol=3e-2, rtol=3e-2)
    assert action.shape == (B, R)
    assert bool(jnp.all((action >= 0) & (action < NUM_ACTIONS)))

    # training path (multinomial sampling + log_prob gather) with an action mask
    avail = jnp.ones((B, R, NUM_ACTIONS), jnp.float32).at[0, 0, 1].set(0.0)
    a2, e2, lp2, p2 = policy_net_single_forward(
        params, x, test=False, available_actions=avail, key=ks)
    jax.block_until_ready((a2, e2, lp2, p2))
    assert a2.shape == (B * R, 1)
    assert lp2.shape == (B * R, 1)
    assert p2.shape == (B * R, NUM_ACTIONS)
    assert int(a2[0, 0]) == 0          # masked action can never be sampled
    assert float(e2[0, 0, 1]) == 0.0   # entropy zeroed at the unavailable action

    print("KERNEL_OK")
</pallas_src>

<mosaic_0001>
module attributes {stable_mosaic.version = 11 : i64} {
  func.func @_policy_kernel(%arg0: i32, %arg1: memref<8x32xbf16, #tpu.memory_space<vmem>>, %arg2: memref<32x128xbf16, #tpu.memory_space<vmem>>, %arg3: memref<1x128xf32, #tpu.memory_space<vmem>>, %arg4: memref<128x64xbf16, #tpu.memory_space<vmem>>, %arg5: memref<1x64xf32, #tpu.memory_space<vmem>>, %arg6: memref<64x2xbf16, #tpu.memory_space<vmem>>, %arg7: memref<1x2xf32, #tpu.memory_space<vmem>>, %arg8: memref<8x8xf32, #tpu.memory_space<vmem>>) attributes {dimension_semantics = [#tpu.dimension_semantics<parallel>], iteration_bounds = array<i64: 1>, scalar_prefetch = 0 : i64, scratch_operands = 0 : i64, tpu.core_type = #tpu.core_type<tc>, window_params = [{transform_indices = @transform_0, window_bounds = array<i64: 8, 32>}, {pipeline_mode = #tpu.pipeline_mode<synchronous>, transform_indices = @transform_1, window_bounds = array<i64: 32, 128>}, {pipeline_mode = #tpu.pipeline_mode<synchronous>, transform_indices = @transform_2, window_bounds = array<i64: 1, 128>}, {pipeline_mode = #tpu.pipeline_mode<synchronous>, transform_indices = @transform_3, window_bounds = array<i64: 128, 64>}, {pipeline_mode = #tpu.pipeline_mode<synchronous>, transform_indices = @transform_4, window_bounds = array<i64: 1, 64>}, {pipeline_mode = #tpu.pipeline_mode<synchronous>, transform_indices = @transform_5, window_bounds = array<i64: 64, 2>}, {pipeline_mode = #tpu.pipeline_mode<synchronous>, transform_indices = @transform_6, window_bounds = array<i64: 1, 2>}, {transform_indices = @transform_7, window_bounds = array<i64: 8, 8>}]} {
    %c0 = arith.constant 0 : index
    %c0_0 = arith.constant 0 : index
    %0 = vector.load %arg1[%c0, %c0_0] : memref<8x32xbf16, #tpu.memory_space<vmem>>, vector<8x32xbf16>
    %c0_1 = arith.constant 0 : index
    %c0_2 = arith.constant 0 : index
    %1 = vector.load %arg2[%c0_1, %c0_2] : memref<32x128xbf16, #tpu.memory_space<vmem>>, vector<32x128xbf16>
    %cst = arith.constant dense<0.000000e+00> : vector<8x128xf32>
    %2 = tpu.matmul %0, %1, %cst {dimension_numbers = #tpu.dot_dimension_numbers<[1], [0], [0], [1], [0, 0, 1, 1], [], []>} : vector<8x32xbf16>, vector<32x128xbf16>, vector<8x128xf32> -> vector<8x128xf32>
    %c0_3 = arith.constant 0 : index
    %c0_4 = arith.constant 0 : index
    %3 = vector.load %arg3[%c0_3, %c0_4] : memref<1x128xf32, #tpu.memory_space<vmem>>, vector<1x128xf32>
    %4 = vector.broadcast %3 : vector<1x128xf32> to vector<8x128xf32>
    %5 = arith.addf %2, %4 : vector<8x128xf32>
    %cst_5 = arith.constant 0.00999999977 : f32
    %6 = vector.broadcast %cst_5 : f32 to vector<8x128xf32>
    %7 = arith.mulf %6, %5 : vector<8x128xf32>
    %8 = arith.maximumf %5, %7 : vector<8x128xf32>
    %9 = arith.truncf %8 : vector<8x128xf32> to vector<8x128xbf16>
    %c0_6 = arith.constant 0 : index
    %c0_7 = arith.constant 0 : index
    %10 = vector.load %arg4[%c0_6, %c0_7] : memref<128x64xbf16, #tpu.memory_space<vmem>>, vector<128x64xbf16>
    %cst_8 = arith.constant dense<0.000000e+00> : vector<8x64xf32>
    %11 = tpu.matmul %9, %10, %cst_8 {dimension_numbers = #tpu.dot_dimension_numbers<[1], [0], [0], [1], [0, 0, 1, 1], [], []>} : vector<8x128xbf16>, vector<128x64xbf16>, vector<8x64xf32> -> vector<8x64xf32>
    %c0_9 = arith.constant 0 : index
    %c0_10 = arith.constant 0 : index
    %12 = vector.load %arg5[%c0_9, %c0_10] : memref<1x64xf32, #tpu.memory_space<vmem>>, vector<1x64xf32>
    %13 = vector.broadcast %12 : vector<1x64xf32> to vector<8x64xf32>
    %14 = arith.addf %11, %13 : vector<8x64xf32>
    %cst_11 = arith.constant 0.00999999977 : f32
    %15 = vector.broadcast %cst_11 : f32 to vector<8x64xf32>
    %16 = arith.mulf %15, %14 : vector<8x64xf32>
    %17 = arith.maximumf %14, %16 : vector<8x64xf32>
    %18 = arith.truncf %17 : vector<8x64xf32> to vector<8x64xbf16>
    %c0_12 = arith.constant 0 : index
    %c0_13 = arith.constant 0 : index
    %19 = vector.load %arg6[%c0_12, %c0_13] : memref<64x2xbf16, #tpu.memory_space<vmem>>, vector<64x2xbf16>
    %cst_14 = arith.constant dense<0.000000e+00> : vector<8x2xf32>
    %20 = tpu.matmul %18, %19, %cst_14 {dimension_numbers = #tpu.dot_dimension_numbers<[1], [0], [0], [1], [0, 0, 1, 1], [], []>} : vector<8x64xbf16>, vector<64x2xbf16>, vector<8x2xf32> -> vector<8x2xf32>
    %c0_15 = arith.constant 0 : index
    %c0_16 = arith.constant 0 : index
    %21 = vector.load %arg7[%c0_15, %c0_16] : memref<1x2xf32, #tpu.memory_space<vmem>>, vector<1x2xf32>
    %22 = vector.broadcast %21 : vector<1x2xf32> to vector<8x2xf32>
    %23 = arith.addf %20, %22 : vector<8x2xf32>
    %cst_17 = arith.constant dense<0xFF800000> : vector<8xf32>
    %24 = vector.multi_reduction <maximumf>, %23, %cst_17 [1] : vector<8x2xf32> to vector<8xf32>
    %25 = vector.shape_cast %24 : vector<8xf32> to vector<8x1xf32>
    %26 = vector.broadcast %25 : vector<8x1xf32> to vector<8x2xf32>
    %27 = arith.subf %23, %26 : vector<8x2xf32>
    %28 = math.exp %27 : vector<8x2xf32>
    %cst_18 = arith.constant dense<0.000000e+00> : vector<8xf32>
    %29 = vector.multi_reduction <add>, %28, %cst_18 [1] : vector<8x2xf32> to vector<8xf32>
    %30 = vector.shape_cast %29 : vector<8xf32> to vector<8x1xf32>
    %31 = tpu.reciprocal %30 : vector<8x1xf32> -> vector<8x1xf32>
    %32 = vector.broadcast %31 : vector<8x1xf32> to vector<8x2xf32>
    %33 = arith.mulf %28, %32 : vector<8x2xf32>
    %34 = math.log %30 : vector<8x1xf32>
    %35 = vector.broadcast %34 : vector<8x1xf32> to vector<8x2xf32>
    %36 = arith.subf %27, %35 : vector<8x2xf32>
    %37 = arith.mulf %36, %33 : vector<8x2xf32>
    %cst_19 = arith.constant 0.000000e+00 : f32
    %38 = vector.broadcast %cst_19 : f32 to vector<8x2xf32>
    %39 = arith.subf %38, %37 : vector<8x2xf32>
    %40 = tpu.iota {dimensions = array<i32: 1>} : vector<8x2xi32>
    %cst_20 = arith.constant dense<0xFF800000> : vector<8xf32>
    %41 = vector.multi_reduction <maximumf>, %33, %cst_20 [1] : vector<8x2xf32> to vector<8xf32>
    %42 = vector.shape_cast %41 : vector<8xf32> to vector<8x1xf32>
    %43 = vector.broadcast %42 : vector<8x1xf32> to vector<8x2xf32>
    %44 = arith.cmpf oge, %33, %43 : vector<8x2xf32>
    %c2_i32 = arith.constant 2 : i32
    %45 = vector.broadcast %c2_i32 : i32 to vector<8x2xi32>
    %46 = arith.select %44, %40, %45 : vector<8x2xi1>, vector<8x2xi32>
    %cst_21 = arith.constant dense<2147483647> : vector<8xi32>
    %47 = vector.multi_reduction <minsi>, %46, %cst_21 [1] : vector<8x2xi32> to vector<8xi32>
    %48 = vector.shape_cast %47 : vector<8xi32> to vector<8x1xi32>
    %49 = arith.sitofp %48 : vector<8x1xi32> to vector<8x1xf32>
    %cst_22 = arith.constant 0.000000e+00 : f32
    %50 = vector.broadcast %cst_22 : f32 to vector<8x1xf32>
    %51 = tpu.concatenate %33, %36, %39, %49, %50 in 1 : vector<8x2xf32>, vector<8x2xf32>, vector<8x2xf32>, vector<8x1xf32>, vector<8x1xf32> -> vector<8x8xf32>
    %c0_23 = arith.constant 0 : index
    %c0_24 = arith.constant 0 : index
    %52 = vector.load %arg8[%c0_23, %c0_24] : memref<8x8xf32, #tpu.memory_space<vmem>>, vector<8x8xf32>
    tpu.vector_store %arg8[%c0_23, %c0_24], %51 {strides = array<i32>} : memref<8x8xf32, #tpu.memory_space<vmem>>, vector<8x8xf32>,
    return
  }
  func.func @transform_0(%arg0: i32) -> (i32, i32) {
    %c0_i32 = arith.constant 0 : i32
    %c0_i32_0 = arith.constant 0 : i32
    return %arg0, %c0_i32 : i32, i32
  }
  func.func @transform_1(%arg0: i32) -> (i32, i32) {
    %c0_i32 = arith.constant 0 : i32
    %c0_i32_0 = arith.constant 0 : i32
    %c0_i32_1 = arith.constant 0 : i32
    return %c0_i32, %c0_i32_0 : i32, i32
  }
  func.func @transform_2(%arg0: i32) -> (i32, i32) {
    %c0_i32 = arith.constant 0 : i32
    %c0_i32_0 = arith.constant 0 : i32
    %c0_i32_1 = arith.constant 0 : i32
    return %c0_i32, %c0_i32_0 : i32, i32
  }
  func.func @transform_3(%arg0: i32) -> (i32, i32) {
    %c0_i32 = arith.constant 0 : i32
    %c0_i32_0 = arith.constant 0 : i32
    %c0_i32_1 = arith.constant 0 : i32
    return %c0_i32, %c0_i32_0 : i32, i32
  }
  func.func @transform_4(%arg0: i32) -> (i32, i32) {
    %c0_i32 = arith.constant 0 : i32
    %c0_i32_0 = arith.constant 0 : i32
    %c0_i32_1 = arith.constant 0 : i32
    return %c0_i32, %c0_i32_0 : i32, i32
  }
  func.func @transform_5(%arg0: i32) -> (i32, i32) {
    %c0_i32 = arith.constant 0 : i32
    %c0_i32_0 = arith.constant 0 : i32
    %c0_i32_1 = arith.constant 0 : i32
    return %c0_i32, %c0_i32_0 : i32, i32
  }
  func.func @transform_6(%arg0: i32) -> (i32, i32) {
    %c0_i32 = arith.constant 0 : i32
    %c0_i32_0 = arith.constant 0 : i32
    %c0_i32_1 = arith.constant 0 : i32
    return %c0_i32, %c0_i32_0 : i32, i32
  }
  func.func @transform_7(%arg0: i32) -> (i32, i32) {
    %c0_i32 = arith.constant 0 : i32
    %c0_i32_0 = arith.constant 0 : i32
    return %arg0, %c0_i32 : i32, i32
  }
}

</mosaic_0001>

<llo_original>
// kernel: tpu_custom_call.1
$region0: #{tpu_custom_call.1}
  #allocation0 [shape = 'u32[]', space=smem, size = 0x4, offset = 0x4, fixed_abs, tag = 'smem constant byte address 0x4 - core index']
  #allocation1 [shape = 'u32[144,128]{1,0:T(1,128)}', space=vmem, size = 0x12000, scoped, tag = 'internal scratch']
  %s0 = inlined_call_operand.vmem [shape: bf16[8,32], index: 0, kind: input, shape index: {}]
  %s1 = inlined_call_operand.vmem [shape: bf16[32,128], index: 1, kind: input, shape index: {}]
  %s2 = inlined_call_operand.vmem [shape: f32[1,128], index: 2, kind: input, shape index: {}]
  %s3 = inlined_call_operand.vmem [shape: bf16[128,64], index: 3, kind: input, shape index: {}]
  %s4 = inlined_call_operand.vmem [shape: f32[1,64], index: 4, kind: input, shape index: {}]
  %s5 = inlined_call_operand.vmem [shape: bf16[64,2], index: 5, kind: input, shape index: {}]
  %s6 = inlined_call_operand.vmem [shape: f32[1,2], index: 6, kind: input, shape index: {}]
  %s7 = inlined_call_operand.hbm [shape: f32[8,8], index: 7, kind: output, shape index: {}]
  %s8 = sld [smem:[#allocation0]]
  $region38: #{tpu_custom_call.1} parent=0
    _
  %s10 = ssub.s32 1, %s8
  %s11 = scalar_select 0, %s10, %s8
  $region1: #{tpu_custom_call.1} parent=0
    #allocation2 [shape = 'u8[4096]{0}', space=vmem, size = 0x1000, scoped, tag = 'output window, operand 0, single buffered']
    #allocation3 [shape = 's32[1]{0}', space=sflag, size = 0x4, scoped, tag = 'scoped memory for tpu_custom_call.1']
    %12 = vsyncpa [#allocation3], 0
    // Predicated region
    $region2: #{tpu_custom_call.1} parent=1 // pred_check
      _
    $region3: #{tpu_custom_call.1} parent=1 // pred_check_branch
      %14 = sbr.rel (0) target = $region5
    $region4: #{tpu_custom_call.1} parent=1 // pred_region
      _
    $region5: #{tpu_custom_call.1} parent=1 // pred_fallthru
      _
    // Predicated region
    $region6: #{tpu_custom_call.1} parent=1 // pred_check
      _
    $region7: #{tpu_custom_call.1} parent=1 // pred_check_branch
      %16 = sbr.rel (0) target = $region9
    $region8: #{tpu_custom_call.1} parent=1 // pred_region
      _
    $region9: #{tpu_custom_call.1} parent=1 // pred_fallthru
      _
    // Predicated region
    $region10: #{tpu_custom_call.1} parent=1 // pred_check
      _
    $region11: #{tpu_custom_call.1} parent=1 // pred_check_branch
      %18 = sbr.rel (0) target = $region13
    $region12: #{tpu_custom_call.1} parent=1 // pred_region
      _
    $region13: #{tpu_custom_call.1} parent=1 // pred_fallthru
      _
    // Predicated region
    $region14: #{tpu_custom_call.1} parent=1 // pred_check
      _
    $region15: #{tpu_custom_call.1} parent=1 // pred_check_branch
      %20 = sbr.rel (0) target = $region17
    $region16: #{tpu_custom_call.1} parent=1 // pred_region
      _
    $region17: #{tpu_custom_call.1} parent=1 // pred_fallthru
      _
    // Predicated region
    $region18: #{tpu_custom_call.1} parent=1 // pred_check
      _
    $region19: #{tpu_custom_call.1} parent=1 // pred_check_branch
      %22 = sbr.rel (0) target = $region21
    $region20: #{tpu_custom_call.1} parent=1 // pred_region
      _
    $region21: #{tpu_custom_call.1} parent=1 // pred_fallthru
      _
    // Predicated region
    $region22: #{tpu_custom_call.1} parent=1 // pred_check
      _
    $region23: #{tpu_custom_call.1} parent=1 // pred_check_branch
      %24 = sbr.rel (0) target = $region25
    $region24: #{tpu_custom_call.1} parent=1 // pred_region
      _
    $region25: #{tpu_custom_call.1} parent=1 // pred_fallthru
      _
    // Predicated region
    $region26: #{tpu_custom_call.1} parent=1 // pred_check
      _
    $region27: #{tpu_custom_call.1} parent=1 // pred_check_branch
      %26 = sbr.rel (0) target = $region29
    $region28: #{tpu_custom_call.1} parent=1 // pred_region
      _
    $region29: #{tpu_custom_call.1} parent=1 // pred_fallthru
      _
    %v28 = vld [vmem:[%s0] sm:$0xf]
    %v29 = vld [vmem:[%s1] sm:$0xf]
    %v30 = vld [vmem:[%s1 + $0x4] sm:$0xf]
    %v31 = vld [vmem:[%s1 + $0x8] sm:$0xf]
    %v32 = vld [vmem:[%s1 + $0xc] sm:$0xf]
    %v33 = vld [vmem:[%s2] sm:$0x1]
    %v35 = vlaneseq
    %v36 = vshrl.u32 %v35, 7
    %v37 = vsub.s32 0, %v36
    %v38 = vrot.slane %v33, %v37
    %v44 = vunpack.c.l.b16 %v29
    %v45 = vunpack.c.l.b16 %v30
    %v46 = vunpack.c.l.b16 %v31
    %v47 = vunpack.c.l.b16 %v32
    %v48 = vpack.c.b16 %v45, %v44
    %v49 = vpack.c.b16 %v47, %v46
    %vm52 = vcmask 261120
    %v54 = vsel %vm52, %v28, 0
    %56 = vmatprep.subr.bf16.mxu0 0
    %57 = vmatpush1.bf16.msra.mxu0 %v48
    %58 = vmatprep.subr.bf16.mxu0 0
    %59 = vmatpush1.bf16.msra.mxu0 %v49
    %60 = vmatprep.subr.bf16.mxu0 0
    %61 = vmatpush1.bf16.msra.mxu0 0
    %62 = vmatprep.subr.bf16.mxu0 0
    %63 = vmatpush1.bf16.msra.mxu0 0
    %64 = vmatprep.subr.bf16.mxu0 0
    %65 = vmatpush1.bf16.msra.mxu0 0
    %66 = vmatprep.subr.bf16.mxu0 0
    %67 = vmatpush1.bf16.msra.mxu0 0
    %68 = vmatprep.subr.bf16.mxu0 0
    %69 = vmatpush1.bf16.msra.mxu0 0
    %70 = vmatprep.subr.bf16.mxu0 0
    %71 = vmatpush1.bf16.msra.mxu0 0
    %72 = vmatprep.subr.bf16.mxu0 0
    %73 = vmatpush1.bf16.msra.mxu0 0
    %74 = vmatprep.subr.bf16.mxu0 0
    %75 = vmatpush1.bf16.msra.mxu0 0
    %76 = vmatprep.subr.bf16.mxu0 0
    %77 = vmatpush1.bf16.msra.mxu0 0
    %78 = vmatprep.subr.bf16.mxu0 0
    %79 = vmatpush1.bf16.msra.mxu0 0
    %80 = vmatprep.subr.bf16.mxu0 0
    %81 = vmatpush1.bf16.msra.mxu0 0
    %82 = vmatprep.subr.bf16.mxu0 0
    %83 = vmatpush1.bf16.msra.mxu0 0
    %84 = vmatprep.subr.bf16.mxu0 0
    %85 = vmatpush1.bf16.msra.mxu0 0
    %86 = vmatprep.subr.bf16.mxu0 0
    %87 = vmatpush1.bf16.msra.mxu0 0
    %88 = vmatprep.mubr.bf16.mxu0 0
    %89 = vmatmul.mubr.bf16.gmra.mrb[0].mxu0 %v54
    %v90 = vpop.f32.mrb[0].mxu0
    %v91 = vadd.f32 %v38, %v90
    %v92 = vpop.f32.mrb[0].mxu0
    %v93 = vpop.f32.mrb[0].mxu0
    %v94 = vpop.f32.mrb[0].mxu0
    %95 = vdwg.mxu0
    %v96 = vmul.f32 %v91, 0.01
    %v97 = vmax.f32 %v91, %v96
    %v98 = vpack.c.bf16 %v97, %v97
    %v99 = vld [vmem:[%s3] sm:$0xf]
    %v100 = vld [vmem:[%s3 + $0x4] sm:$0xf]
    %v101 = vld [vmem:[%s3 + $0x8] sm:$0xf]
    %v102 = vld [vmem:[%s3 + $0xc] sm:$0xf]
    %v103 = vld [vmem:[%s3 + $0x10] sm:$0xf]
    %v104 = vld [vmem:[%s3 + $0x14] sm:$0xf]
    %v105 = vld [vmem:[%s3 + $0x18] sm:$0xf]
    %v106 = vld [vmem:[%s3 + $0x1c] sm:$0xf]
    %v107 = vld [vmem:[%s3 + $0x20] sm:$0xf]
    %v108 = vld [vmem:[%s3 + $0x24] sm:$0xf]
    %v109 = vld [vmem:[%s3 + $0x28] sm:$0xf]
    %v110 = vld [vmem:[%s3 + $0x2c] sm:$0xf]
    %v111 = vld [vmem:[%s3 + $0x30] sm:$0xf]
    %v112 = vld [vmem:[%s3 + $0x34] sm:$0xf]
    %v113 = vld [vmem:[%s3 + $0x38] sm:$0xf]
    %v114 = vld [vmem:[%s3 + $0x3c] sm:$0xf]
    %v115 = vld [vmem:[%s4] sm:$0x1]
    %v117 = vlaneseq
    %v118 = vshrl.u32 %v117, 7
    %v119 = vsub.s32 0, %v118
    %v120 = vrot.slane %v115, %v119
    %v138 = vunpack.c.l.b16 %v99
    %v139 = vunpack.c.l.b16 %v100
    %v140 = vunpack.c.l.b16 %v101
    %v141 = vunpack.c.l.b16 %v102
    %v142 = vunpack.c.l.b16 %v103
    %v143 = vunpack.c.l.b16 %v104
    %v144 = vunpack.c.l.b16 %v105
    %v145 = vunpack.c.l.b16 %v106
    %v146 = vunpack.c.l.b16 %v107
    %v147 = vunpack.c.l.b16 %v108
    %v148 = vunpack.c.l.b16 %v109
    %v149 = vunpack.c.l.b16 %v110
    %v150 = vunpack.c.l.b16 %v111
    %v151 = vunpack.c.l.b16 %v112
    %v152 = vunpack.c.l.b16 %v113
    %v153 = vunpack.c.l.b16 %v114
    %v154 = vpack.c.b16 %v139, %v138
    %v155 = vpack.c.b16 %v141, %v140
    %v156 = vpack.c.b16 %v143, %v142
    %v157 = vpack.c.b16 %v145, %v144
    %v158 = vpack.c.b16 %v147, %v146
    %v159 = vpack.c.b16 %v149, %v148
    %v160 = vpack.c.b16 %v151, %v150
    %v161 = vpack.c.b16 %v153, %v152
    %170 = vmatprep.subr.bf16.mxu0 0
    %171 = vmatpush1.bf16.msra.mxu0 %v154
    %172 = vmatprep.subr.bf16.mxu0 0
    %173 = vmatpush1.bf16.msra.mxu0 %v155
    %174 = vmatprep.subr.bf16.mxu0 0
    %175 = vmatpush1.bf16.msra.mxu0 %v156
    %176 = vmatprep.subr.bf16.mxu0 0
    %177 = vmatpush1.bf16.msra.mxu0 %v157
    %178 = vmatprep.subr.bf16.mxu0 0
    %179 = vmatpush1.bf16.msra.mxu0 %v158
    %180 = vmatprep.subr.bf16.mxu0 0
    %181 = vmatpush1.bf16.msra.mxu0 %v159
    %182 = vmatprep.subr.bf16.mxu0 0
    %183 = vmatpush1.bf16.msra.mxu0 %v160
    %184 = vmatprep.subr.bf16.mxu0 0
    %185 = vmatpush1.bf16.msra.mxu0 %v161
    %186 = vmatprep.subr.bf16.mxu0 0
    %187 = vmatpush1.bf16.msra.mxu0 0
    %188 = vmatprep.subr.bf16.mxu0 0
    %189 = vmatpush1.bf16.msra.mxu0 0
    %190 = vmatprep.subr.bf16.mxu0 0
    %191 = vmatpush1.bf16.msra.mxu0 0
    %192 = vmatprep.subr.bf16.mxu0 0
    %193 = vmatpush1.bf16.msra.mxu0 0
    %194 = vmatprep.subr.bf16.mxu0 0
    %195 = vmatpush1.bf16.msra.mxu0 0
    %196 = vmatprep.subr.bf16.mxu0 0
    %197 = vmatpush1.bf16.msra.mxu0 0
    %198 = vmatprep.subr.bf16.mxu0 0
    %199 = vmatpush1.bf16.msra.mxu0 0
    %200 = vmatprep.subr.bf16.mxu0 0
    %201 = vmatpush1.bf16.msra.mxu0 0
    %202 = vmatprep.mubr.bf16.mxu0 0
    %203 = vmatmul.mubr.bf16.gmra.mrb[0].mxu0 %v98
    %v204 = vpop.f32.mrb[0].mxu0
    %v205 = vadd.f32 %v120, %v204
    %v206 = vpop.f32.mrb[0].mxu0
    %v207 = vpop.f32.mrb[0].mxu0
    %v208 = vpop.f32.mrb[0].mxu0
    %209 = vdwg.mxu0
    %v210 = vmul.f32 %v205, 0.01
    %v211 = vmax.f32 %v205, %v210
    %v212 = vpack.c.bf16 %v211, %v211
    %v213 = vld [vmem:[%s5] sm:$0xf]
    %v214 = vld [vmem:[%s5 + $0x4] sm:$0xf]
    %v215 = vld [vmem:[%s5 + $0x8] sm:$0xf]
    %v216 = vld [vmem:[%s5 + $0xc] sm:$0xf]
    %v217 = vld [vmem:[%s5 + $0x10] sm:$0xf]
    %v218 = vld [vmem:[%s5 + $0x14] sm:$0xf]
    %v219 = vld [vmem:[%s5 + $0x18] sm:$0xf]
    %v220 = vld [vmem:[%s5 + $0x1c] sm:$0xf]
    %v221 = vld [vmem:[%s6] sm:$0x1]
    %v223 = vlaneseq
    %v224 = vshrl.u32 %v223, 7
    %v225 = vsub.s32 0, %v224
    %v226 = vrot.slane %v221, %v225
    %v236 = vunpack.c.l.b16 %v213
    %v237 = vunpack.c.l.b16 %v214
    %v238 = vunpack.c.l.b16 %v215
    %v239 = vunpack.c.l.b16 %v216
    %v240 = vunpack.c.l.b16 %v217
    %v241 = vunpack.c.l.b16 %v218
    %v242 = vunpack.c.l.b16 %v219
    %v243 = vunpack.c.l.b16 %v220
    %v244 = vpack.c.b16 %v237, %v236
    %v245 = vpack.c.b16 %v239, %v238
    %v246 = vpack.c.b16 %v241, %v240
    %v247 = vpack.c.b16 %v243, %v242
    %vm252 = vcmask 523264
    %v254 = vsel %vm252, %v212, 0
    %256 = vmatprep.subr.bf16.mxu0 0
    %257 = vmatpush1.bf16.msra.mxu0 %v244
    %258 = vmatprep.subr.bf16.mxu0 0
    %259 = vmatpush1.bf16.msra.mxu0 %v245
    %260 = vmatprep.subr.bf16.mxu0 0
    %261 = vmatpush1.bf16.msra.mxu0 %v246
    %262 = vmatprep.subr.bf16.mxu0 0
    %263 = vmatpush1.bf16.msra.mxu0 %v247
    %264 = vmatprep.subr.bf16.mxu0 0
    %265 = vmatpush1.bf16.msra.mxu0 0
    %266 = vmatprep.subr.bf16.mxu0 0
    %267 = vmatpush1.bf16.msra.mxu0 0
    %268 = vmatprep.subr.bf16.mxu0 0
    %269 = vmatpush1.bf16.msra.mxu0 0
    %270 = vmatprep.subr.bf16.mxu0 0
    %271 = vmatpush1.bf16.msra.mxu0 0
    %272 = vmatprep.subr.bf16.mxu0 0
    %273 = vmatpush1.bf16.msra.mxu0 0
    %274 = vmatprep.subr.bf16.mxu0 0
    %275 = vmatpush1.bf16.msra.mxu0 0
    %276 = vmatprep.subr.bf16.mxu0 0
    %277 = vmatpush1.bf16.msra.mxu0 0
    %278 = vmatprep.subr.bf16.mxu0 0
    %279 = vmatpush1.bf16.msra.mxu0 0
    %280 = vmatprep.subr.bf16.mxu0 0
    %281 = vmatpush1.bf16.msra.mxu0 0
    %282 = vmatprep.subr.bf16.mxu0 0
    %283 = vmatpush1.bf16.msra.mxu0 0
    %284 = vmatprep.subr.bf16.mxu0 0
    %285 = vmatpush1.bf16.msra.mxu0 0
    %286 = vmatprep.subr.bf16.mxu0 0
    %287 = vmatpush1.bf16.msra.mxu0 0
    %288 = vmatprep.mubr.bf16.mxu0 0
    %289 = vmatmul.mubr.bf16.gmra.mrb[0].mxu0 %v254
    %v290 = vpop.f32.mrb[0].mxu0
    %v291 = vadd.f32 %v226, %v290
    %v292 = vpop.f32.mrb[0].mxu0
    %v293 = vpop.f32.mrb[0].mxu0
    %v294 = vpop.f32.mrb[0].mxu0
    %295 = vdwg.mxu0
    %vm296 = vcmask 15360
    %v297 = vsel %vm296, %v291, -inf
    %298 = vmax.xlane.f32.xlu0 %v297
    %v299 = vpop.xlane.xlu0 %298
    %v300 = vsub.f32 %v291, %v299
    %v301 = vmul.f32 %v300, 1.442695
    %v302 = vpow.pop %v301
    %v303 = vsel %vm296, %v302, 0.0
    %304 = vadd.xlane.f32.xlu0 %v303
    %v305 = vpop.xlane.xlu0 %304
    %v306 = vrcp.pop %v305
    %v307 = vmul.f32 %v302, %v306
    %v308 = vlog2.pop %v305
    %v309 = vmul.f32 %v308, 0.6931472
    %v310 = vsub.f32 %v300, %v309
    %v311 = vmul.f32 %v310, %v307
    %v312 = vsub.f32 0.0, %v311
    %v313 = vlaneseq
    %v314 = vand.u32 %v313, 127
    %v315 = vsel %vm296, %v307, -inf
    %316 = vmax.xlane.f32.xlu0 %v315
    %v317 = vpop.xlane.xlu0 %316
    %vm318 = vcmp.ge.f32.partialorder %v307, %v317
    %v319 = vsel %vm318, %v314, 2
    %v320 = vsel %vm296, %v319, 2147483647
    %v321 = vand.u32 %v320, 65535
    %v322 = vshra.s32 %v320, 16
    %v323 = vcvt.s32.f32 %v321
    %v324 = vcvt.s32.f32 %v322
    %325 = vmin.xlane.f32.xlu0 %v324
    %v326 = vpop.xlane.xlu0 %325
    %vm327 = vcmp.eq.f32.partialorder %v324, %v326
    %v328 = vsel %vm327, %v323, inf
    %329 = vmin.xlane.f32.xlu0 %v328
    %v330 = vpop.xlane.xlu0 %329
    %v331 = vcvt.f32.s32 %v330
    %v332 = vcvt.f32.s32 %v326
    %v333 = vshll.u32 %v332, 16
    %v334 = vadd.s32 %v333, %v331
    %v335 = vcvt.s32.f32 %v334
    %337 = vrot.lane.b32.xlu0 %v310, 2
    %v338 = vpop.permute.xlu0 %337
    %341 = vrot.lane.b32.xlu0 %v312, 4
    %v342 = vpop.permute.xlu0 %341
    %v344 = vsel %vm296, %v307, %v338
    %vm345 = vcmask 31744
    %v346 = vsel %vm345, %v344, %v342
    %vm347 = vcmask 48128
    %v348 = vsel %vm347, %v346, %v335
    %vm349 = vcmask 56320
    %v350 = vsel %vm349, %v348, 0.0
    %vm351 = vcmask 64512
    %352 = vst.msk [vmem:[#allocation2] sm:$0xff] %vm351, %v350
    // Predicated region
    $region30: #{tpu_custom_call.1} parent=1 // pred_check
      _
    $region31: #{tpu_custom_call.1} parent=1 // pred_check_branch
      %354 = sbr.rel (0) target = $region33
    $region32: #{tpu_custom_call.1} parent=1 // pred_region
      %s356 = ssub.s32 128, 128
      %357 = vsyncadd [#allocation3], %s356
      %s359 = sshll.u32 [#allocation2], 4
      %s360 = int_to_ptr.vmem [resolvable:$true] %s359
      %362 = dma.vmem_to_hbm [thread:$0]  %s360, 128, %s7, [#allocation3]
    $region33: #{tpu_custom_call.1} parent=1 // pred_fallthru
      _
    // Predicated region
    $region34: #{tpu_custom_call.1} parent=1 // pred_check
      _
    $region35: #{tpu_custom_call.1} parent=1 // pred_check_branch
      %364 = sbr.rel (0) target = $region37
    $region36: #{tpu_custom_call.1} parent=1 // pred_region
      %365 = dma.done [#allocation3], 128
    $region37: #{tpu_custom_call.1} parent=1 // pred_fallthru
      _
    %366 = vsyncpa [#allocation3], 1

</llo_original>
